<compile_context>
chip_gen: v5e
topology: v5e:2x2
jax: 0.10.0
libtpu: 0.0.40
codegen_flags: <defaults>
</compile_context>

<pallas_src>
import math
from functools import partial

import jax
import jax.numpy as jnp
from jax.experimental import pallas as pl
from jax.experimental.pallas import tpu as pltpu

_INV_SQRT2 = 0.7071067811865476


# ------------------------- in-kernel helpers -------------------------
def _layernorm(x, w, b, eps=1e-5):
    # matches the custom LayerNorm: scalar w/b, eps inside the sqrt, biased var
    mu = jnp.mean(x, axis=-1, keepdims=True)
    mu2 = jnp.mean(x * x, axis=-1, keepdims=True)
    inv_sigma = jax.lax.rsqrt(mu2 - mu * mu + eps)   # rsqrt -> EUP, mul not div
    return w * (x - mu) * inv_sigma + b


def _gelu(x):
    # exact erf GELU, as in the module (f32); multiply instead of divide
    return x * 0.5 * (1.0 + jax.lax.erf(x * _INV_SQRT2))


# ------------------------------ kernel -------------------------------
def layer_kernel(x_ref, m_ref, wx_ref, bx_ref, wo_ref, bo_ref,
                 w1_ref, b1_ref, w2_ref, b2_ref, ln_ref, o_ref, *, d, nh):
    h = d // nh

    x = x_ref[0]            # (L, D) f32
    m = m_ref[...]          # (L, L) f32, already pre-scaled by 1/sqrt(D)

    # ---- ln1 + fused qkv projection (bf16 inputs, f32 accumulation).
    # The q-columns of wx^T / bx were pre-scaled by 1/sqrt(D) in the wrapper.
    ln1x = _layernorm(x, ln_ref[0], ln_ref[1])
    qkv = jnp.dot(ln1x.astype(jnp.bfloat16), wx_ref[...],
                  preferred_element_type=jnp.float32) + bx_ref[...]   # (L, 3D)

    # ---- head-batched attention: build (nh, L, h) q/k/v (leading-axis stack,
    # no lane-axis concat of results).  q already carries the 1/sqrt(D) scale.
    q = jnp.stack([qkv[:, i * h:(i + 1) * h] for i in range(nh)],
                  axis=0).astype(jnp.bfloat16)
    k = jnp.stack([qkv[:, d + i * h: d + (i + 1) * h] for i in range(nh)],
                  axis=0).astype(jnp.bfloat16)
    v = jnp.stack([qkv[:, 2 * d + i * h: 2 * d + (i + 1) * h] for i in range(nh)],
                  axis=0).astype(jnp.bfloat16)

    # scores:  (q*scale) @ k^T + m*scale  ==  (q @ k^T + m) * scale
    s = jnp.einsum('nqc,nkc->nqk', q, k,
                   preferred_element_type=jnp.float32) + m[None]      # (nh,L,L)
    s = s - jnp.max(s, axis=-1, keepdims=True)
    e = jnp.exp(s)
    p = e * pl.reciprocal(jnp.sum(e, axis=-1, keepdims=True), approx=True)

    o_heads = jnp.einsum('nqk,nkc->nqc', p.astype(jnp.bfloat16), v,
                         preferred_element_type=jnp.float32)          # (nh,L,h)

    # ---- output projection accumulated per head (wo^T pre-reshaped to
    #      (nh, h, D) in the wrapper) -> no concatenate along the lane axis ----
    proj = jnp.einsum('nqc,nco->nqo', o_heads.astype(jnp.bfloat16), wo_ref[...],
                      preferred_element_type=jnp.float32)             # (nh,L,D)
    x1 = x + jnp.sum(proj, axis=0) + bo_ref[...]

    # ---- ln2 + FFN + residual ----
    ln2x = _layernorm(x1, ln_ref[2], ln_ref[3])
    h1 = jnp.dot(ln2x.astype(jnp.bfloat16), w1_ref[...],
                 preferred_element_type=jnp.float32) + b1_ref[...]
    g = _gelu(h1)
    ffn = jnp.dot(g.astype(jnp.bfloat16), w2_ref[...],
                  preferred_element_type=jnp.float32) + b2_ref[...]

    # NOTE: at realistic D the output last dim is a multiple of 128 (lane-dense
    # stores); the toy D=32 here is just the test shape.
    o_ref[0] = (x1 + ffn).astype(o_ref.dtype)


# -------------------------- one-time weight prep --------------------------
def prepare_params(wx, bx, wo, bo, w1, b1, w2, b2, *, nh):
    """Transpose / head-reshape / cast weights to bf16 once, outside the call path.

    The 1/sqrt(d) attention scale is folded into the q-projection columns
    (first d columns of wx^T and first d entries of bx) so the kernel never
    multiplies q by the scale; the additive mask is pre-scaled in the wrapper.
    """
    d = wo.shape[0]
    h = d // nh
    scale = 1.0 / math.sqrt(d)
    col_scale = jnp.concatenate([jnp.full((d,), scale, jnp.float32),
                                 jnp.ones((2 * d,), jnp.float32)])
    return dict(
        wxT=(wx.T * col_scale[None, :]).astype(jnp.bfloat16),   # (D, 3D), q scaled
        bx=(bx * col_scale).astype(jnp.float32).reshape(1, -1),
        woTh=wo.T.astype(jnp.bfloat16).reshape(nh, h, d),        # (nh, h, D)
        bo=bo.astype(jnp.float32).reshape(1, -1),
        w1T=w1.T.astype(jnp.bfloat16),                           # (D, 4D)
        b1=b1.astype(jnp.float32).reshape(1, -1),
        w2T=w2.T.astype(jnp.bfloat16),                           # (4D, D)
        b2=b2.astype(jnp.float32).reshape(1, -1),
    )


# ------------------------------ wrapper -------------------------------
@partial(jax.jit, static_argnames=("nh",))
def layer_forward(x, m, params, ln_params, *, nh):
    B, L, D = x.shape
    h = D // nh
    kernel = partial(layer_kernel, d=D, nh=nh)

    # pre-scale the additive mask once (fused into the jit, not per head)
    m_scaled = (m * (1.0 / math.sqrt(D))).astype(jnp.float32)

    def full(shape):
        n = len(shape)
        return pl.BlockSpec(shape, lambda b, n=n: (0,) * n)

    flops = B * (24 * L * D * D + 4 * L * L * D)
    transcendentals = B * (nh * L * L + 4 * L * D + nh * L + 2 * L)
    bytes_accessed = (2 * B * L * D * 4            # x in + out (f32)
                      + L * L * 4                  # mask
                      + 12 * D * D * 2             # bf16 weights
                      + 9 * D * 4 + 16)            # biases + ln scalars

    out = pl.pallas_call(
        kernel,
        out_shape=jax.ShapeDtypeStruct((B, L, D), x.dtype),
        grid_spec=pltpu.PrefetchScalarGridSpec(
            num_scalar_prefetch=0,
            grid=(B,),
            in_specs=[
                pl.BlockSpec((1, L, D), lambda b: (b, 0, 0)),   # x
                full((L, L)),                                   # pre-scaled mask
                full((D, 3 * D)),                               # wx^T  (bf16, q scaled)
                full((1, 3 * D)),                               # bx    (q scaled)
                full((nh, h, D)),                               # wo^T per head (bf16)
                full((1, D)),                                   # bo
                full((D, 4 * D)),                               # w1^T  (bf16)
                full((1, 4 * D)),                               # b1
                full((4 * D, D)),                               # w2^T  (bf16)
                full((1, D)),                                   # b2
                pl.BlockSpec(memory_space=pltpu.MemorySpace.SMEM),  # ln scalars
            ],
            out_specs=pl.BlockSpec((1, L, D), lambda b: (b, 0, 0)),
        ),
        compiler_params=pltpu.CompilerParams(
            dimension_semantics=("parallel",),
            # TODO(synk): for realistic (L, D) add a seq-tile grid axis with an
            # online-softmax (flash-style) accumulator, single-buffer the
            # grid-invariant weight blocks, and derive this limit from tiles.
            vmem_limit_bytes=32 * 1024 * 1024,
        ),
        cost_estimate=pl.CostEstimate(
            flops=flops, transcendentals=transcendentals,
            bytes_accessed=bytes_accessed),
    )(x, m_scaled,
      params["wxT"], params["bx"],
      params["woTh"], params["bo"],
      params["w1T"], params["b1"],
      params["w2T"], params["b2"],
      ln_params)
    return out, m


# --------------------------- pure-JAX reference ---------------------------
def layer_ref(x, m, wx, bx, wo, bo, w1, b1, w2, b2, ln_params, *, nh):
    def ln(z, w, b, eps=1e-5):
        mu = z.mean(-1, keepdims=True)
        mu2 = (z * z).mean(-1, keepdims=True)
        return w * (z - mu) / jnp.sqrt(mu2 - mu * mu + eps) + b

    B, L, D = x.shape
    h = D // nh
    ln1x = ln(x, ln_params[0], ln_params[1])
    qkv = ln1x @ wx.T + bx                              # (B, L, 3D)
    qkv = jnp.swapaxes(qkv, 1, 2).reshape(B, 3 * nh, h, L)
    q, k, v = qkv[:, :nh], qkv[:, nh:2 * nh], qkv[:, 2 * nh:]
    s = (jnp.einsum('bhri,bhrj->bhij', q, k) + m) / math.sqrt(D)
    a = jax.nn.softmax(s, -1)
    H = jnp.einsum('bhic,bhjc->bhij', v, a)
    mha = H.reshape(B, D, L).transpose(0, 2, 1)
    x1 = x + mha @ wo.T + bo
    ln2x = ln(x1, ln_params[2], ln_params[3])
    h1 = ln2x @ w1.T + b1
    g = h1 * 0.5 * (1 + jax.lax.erf(h1 / math.sqrt(2.0)))
    return x1 + g @ w2.T + b2


# -------------------------------- main --------------------------------
if __name__ == "__main__":
    B, L, D, NH = 2, 8, 32, 4
    key = jax.random.PRNGKey(0)
    k0, k1, k2, k3, k4 = jax.random.split(key, 5)

    x = jax.random.normal(k0, (B, L, D), jnp.float32)
    causal = jnp.tril(jnp.ones((L, L), jnp.float32))
    m = jnp.where(causal == 1, 0.0, -1e9).astype(jnp.float32)

    # deterministic nn.Linear-style init: weight ~ N(0, 0.02), bias = 0
    wx = 0.02 * jax.random.normal(k1, (3 * D, D), jnp.float32)
    bx = jnp.zeros((3 * D,), jnp.float32)
    wo = 0.02 * jax.random.normal(k2, (D, D), jnp.float32)
    bo = jnp.zeros((D,), jnp.float32)
    w1 = 0.02 * jax.random.normal(k3, (4 * D, D), jnp.float32)
    b1 = jnp.zeros((4 * D,), jnp.float32)
    w2 = 0.02 * jax.random.normal(k4, (D, 4 * D), jnp.float32)
    b2 = jnp.zeros((D,), jnp.float32)
    # LayerNorm scalar params: [ln1.w, ln1.b, ln2.w, ln2.b]
    ln_params = jnp.array([1.0, 0.0, 1.0, 0.0], jnp.float32)

    params = prepare_params(wx, bx, wo, bo, w1, b1, w2, b2, nh=NH)
    out, m_out = layer_forward(x, m, params, ln_params, nh=NH)
    jax.block_until_ready(out)

    ref = layer_ref(x, m, wx, bx, wo, bo, w1, b1, w2, b2, ln_params, nh=NH)
    assert out.shape == (B, L, D) and m_out.shape == (L, L)
    err = float(jnp.max(jnp.abs(out - ref)))
    # bf16 matmul inputs (f32 accumulate) => relaxed tolerance vs the f32 ref
    assert err < 1e-2, err
    print("KERNEL_OK")
</pallas_src>

<mosaic_0001>
module attributes {stable_mosaic.version = 11 : i64} {
  func.func @layer_kernel(%arg0: i32, %arg1: memref<1x8x32xf32, #tpu.memory_space<vmem>>, %arg2: memref<8x8xf32, #tpu.memory_space<vmem>>, %arg3: memref<32x96xbf16, #tpu.memory_space<vmem>>, %arg4: memref<1x96xf32, #tpu.memory_space<vmem>>, %arg5: memref<4x8x32xbf16, #tpu.memory_space<vmem>>, %arg6: memref<1x32xf32, #tpu.memory_space<vmem>>, %arg7: memref<32x128xbf16, #tpu.memory_space<vmem>>, %arg8: memref<1x128xf32, #tpu.memory_space<vmem>>, %arg9: memref<128x32xbf16, #tpu.memory_space<vmem>>, %arg10: memref<1x32xf32, #tpu.memory_space<vmem>>, %arg11: memref<4xf32, #tpu.memory_space<smem>>, %arg12: memref<1x8x32xf32, #tpu.memory_space<vmem>>) attributes {dimension_semantics = [#tpu.dimension_semantics<parallel>], iteration_bounds = array<i64: 2>, scalar_prefetch = 0 : i64, scratch_operands = 0 : i64, tpu.core_type = #tpu.core_type<tc>, window_params = [{transform_indices = @transform_0, window_bounds = array<i64: 1, 8, 32>}, {pipeline_mode = #tpu.pipeline_mode<synchronous>, transform_indices = @transform_1, window_bounds = array<i64: 8, 8>}, {pipeline_mode = #tpu.pipeline_mode<synchronous>, transform_indices = @transform_2, window_bounds = array<i64: 32, 96>}, {pipeline_mode = #tpu.pipeline_mode<synchronous>, transform_indices = @transform_3, window_bounds = array<i64: 1, 96>}, {pipeline_mode = #tpu.pipeline_mode<synchronous>, transform_indices = @transform_4, window_bounds = array<i64: 4, 8, 32>}, {pipeline_mode = #tpu.pipeline_mode<synchronous>, transform_indices = @transform_5, window_bounds = array<i64: 1, 32>}, {pipeline_mode = #tpu.pipeline_mode<synchronous>, transform_indices = @transform_6, window_bounds = array<i64: 32, 128>}, {pipeline_mode = #tpu.pipeline_mode<synchronous>, transform_indices = @transform_7, window_bounds = array<i64: 1, 128>}, {pipeline_mode = #tpu.pipeline_mode<synchronous>, transform_indices = @transform_8, window_bounds = array<i64: 128, 32>}, {pipeline_mode = #tpu.pipeline_mode<synchronous>, transform_indices = @transform_9, window_bounds = array<i64: 1, 32>}, {transform_indices = @transform_10, window_bounds = array<i64: 4>}, {transform_indices = @transform_11, window_bounds = array<i64: 1, 8, 32>}]} {
    %c0 = arith.constant 0 : index
    %c0_0 = arith.constant 0 : index
    %c0_1 = arith.constant 0 : index
    %0 = vector.load %arg1[%c0, %c0_0, %c0_1] : memref<1x8x32xf32, #tpu.memory_space<vmem>>, vector<1x8x32xf32>
    %1 = vector.shape_cast %0 : vector<1x8x32xf32> to vector<8x32xf32>
    %c0_2 = arith.constant 0 : index
    %c0_3 = arith.constant 0 : index
    %2 = vector.load %arg2[%c0_2, %c0_3] : memref<8x8xf32, #tpu.memory_space<vmem>>, vector<8x8xf32>
    %c0_4 = arith.constant 0 : index
    %3 = memref.load %arg11[%c0_4] : memref<4xf32, #tpu.memory_space<smem>>
    %c1 = arith.constant 1 : index
    %4 = memref.load %arg11[%c1] : memref<4xf32, #tpu.memory_space<smem>>
    %cst = arith.constant dense<0.000000e+00> : vector<8xf32>
    %5 = vector.multi_reduction <add>, %1, %cst [1] : vector<8x32xf32> to vector<8xf32>
    %6 = vector.shape_cast %5 : vector<8xf32> to vector<8x1xf32>
    %cst_5 = arith.constant 3.200000e+01 : f32
    %7 = vector.broadcast %cst_5 : f32 to vector<8x1xf32>
    %8 = arith.divf %6, %7 : vector<8x1xf32>
    %9 = arith.mulf %1, %1 : vector<8x32xf32>
    %cst_6 = arith.constant dense<0.000000e+00> : vector<8xf32>
    %10 = vector.multi_reduction <add>, %9, %cst_6 [1] : vector<8x32xf32> to vector<8xf32>
    %11 = vector.shape_cast %10 : vector<8xf32> to vector<8x1xf32>
    %cst_7 = arith.constant 3.200000e+01 : f32
    %12 = vector.broadcast %cst_7 : f32 to vector<8x1xf32>
    %13 = arith.divf %11, %12 : vector<8x1xf32>
    %14 = arith.mulf %8, %8 : vector<8x1xf32>
    %15 = arith.subf %13, %14 : vector<8x1xf32>
    %cst_8 = arith.constant 9.99999974E-6 : f32
    %16 = vector.broadcast %cst_8 : f32 to vector<8x1xf32>
    %17 = arith.addf %15, %16 : vector<8x1xf32>
    %18 = math.rsqrt %17 : vector<8x1xf32>
    %19 = vector.broadcast %8 : vector<8x1xf32> to vector<8x32xf32>
    %20 = arith.subf %1, %19 : vector<8x32xf32>
    %21 = vector.broadcast %3 : f32 to vector<8x32xf32>
    %22 = arith.mulf %21, %20 : vector<8x32xf32>
    %23 = vector.broadcast %18 : vector<8x1xf32> to vector<8x32xf32>
    %24 = arith.mulf %22, %23 : vector<8x32xf32>
    %25 = vector.broadcast %4 : f32 to vector<8x32xf32>
    %26 = arith.addf %24, %25 : vector<8x32xf32>
    %27 = arith.truncf %26 : vector<8x32xf32> to vector<8x32xbf16>
    %c0_9 = arith.constant 0 : index
    %c0_10 = arith.constant 0 : index
    %28 = vector.load %arg3[%c0_9, %c0_10] : memref<32x96xbf16, #tpu.memory_space<vmem>>, vector<32x96xbf16>
    %cst_11 = arith.constant dense<0.000000e+00> : vector<8x96xf32>
    %29 = tpu.matmul %27, %28, %cst_11 {dimension_numbers = #tpu.dot_dimension_numbers<[1], [0], [0], [1], [0, 0, 1, 1], [], []>} : vector<8x32xbf16>, vector<32x96xbf16>, vector<8x96xf32> -> vector<8x96xf32>
    %c0_12 = arith.constant 0 : index
    %c0_13 = arith.constant 0 : index
    %30 = vector.load %arg4[%c0_12, %c0_13] : memref<1x96xf32, #tpu.memory_space<vmem>>, vector<1x96xf32>
    %31 = vector.broadcast %30 : vector<1x96xf32> to vector<8x96xf32>
    %32 = arith.addf %29, %31 : vector<8x96xf32>
    %33 = vector.extract_strided_slice %32 {offsets = [0, 0], sizes = [8, 8], strides = [1, 1]} : vector<8x96xf32> to vector<8x8xf32>
    %34 = vector.extract_strided_slice %32 {offsets = [0, 8], sizes = [8, 8], strides = [1, 1]} : vector<8x96xf32> to vector<8x8xf32>
    %35 = vector.extract_strided_slice %32 {offsets = [0, 16], sizes = [8, 8], strides = [1, 1]} : vector<8x96xf32> to vector<8x8xf32>
    %36 = vector.extract_strided_slice %32 {offsets = [0, 24], sizes = [8, 8], strides = [1, 1]} : vector<8x96xf32> to vector<8x8xf32>
    %37 = vector.shape_cast %33 : vector<8x8xf32> to vector<1x8x8xf32>
    %38 = vector.shape_cast %34 : vector<8x8xf32> to vector<1x8x8xf32>
    %39 = vector.shape_cast %35 : vector<8x8xf32> to vector<1x8x8xf32>
    %40 = vector.shape_cast %36 : vector<8x8xf32> to vector<1x8x8xf32>
    %41 = tpu.concatenate %37, %38, %39, %40 in 0 : vector<1x8x8xf32>, vector<1x8x8xf32>, vector<1x8x8xf32>, vector<1x8x8xf32> -> vector<4x8x8xf32>
    %42 = arith.truncf %41 : vector<4x8x8xf32> to vector<4x8x8xbf16>
    %43 = vector.extract_strided_slice %32 {offsets = [0, 32], sizes = [8, 8], strides = [1, 1]} : vector<8x96xf32> to vector<8x8xf32>
    %44 = vector.extract_strided_slice %32 {offsets = [0, 40], sizes = [8, 8], strides = [1, 1]} : vector<8x96xf32> to vector<8x8xf32>
    %45 = vector.extract_strided_slice %32 {offsets = [0, 48], sizes = [8, 8], strides = [1, 1]} : vector<8x96xf32> to vector<8x8xf32>
    %46 = vector.extract_strided_slice %32 {offsets = [0, 56], sizes = [8, 8], strides = [1, 1]} : vector<8x96xf32> to vector<8x8xf32>
    %47 = vector.shape_cast %43 : vector<8x8xf32> to vector<1x8x8xf32>
    %48 = vector.shape_cast %44 : vector<8x8xf32> to vector<1x8x8xf32>
    %49 = vector.shape_cast %45 : vector<8x8xf32> to vector<1x8x8xf32>
    %50 = vector.shape_cast %46 : vector<8x8xf32> to vector<1x8x8xf32>
    %51 = tpu.concatenate %47, %48, %49, %50 in 0 : vector<1x8x8xf32>, vector<1x8x8xf32>, vector<1x8x8xf32>, vector<1x8x8xf32> -> vector<4x8x8xf32>
    %52 = arith.truncf %51 : vector<4x8x8xf32> to vector<4x8x8xbf16>
    %53 = vector.extract_strided_slice %32 {offsets = [0, 64], sizes = [8, 8], strides = [1, 1]} : vector<8x96xf32> to vector<8x8xf32>
    %54 = vector.extract_strided_slice %32 {offsets = [0, 72], sizes = [8, 8], strides = [1, 1]} : vector<8x96xf32> to vector<8x8xf32>
    %55 = vector.extract_strided_slice %32 {offsets = [0, 80], sizes = [8, 8], strides = [1, 1]} : vector<8x96xf32> to vector<8x8xf32>
    %56 = vector.extract_strided_slice %32 {offsets = [0, 88], sizes = [8, 8], strides = [1, 1]} : vector<8x96xf32> to vector<8x8xf32>
    %57 = vector.shape_cast %53 : vector<8x8xf32> to vector<1x8x8xf32>
    %58 = vector.shape_cast %54 : vector<8x8xf32> to vector<1x8x8xf32>
    %59 = vector.shape_cast %55 : vector<8x8xf32> to vector<1x8x8xf32>
    %60 = vector.shape_cast %56 : vector<8x8xf32> to vector<1x8x8xf32>
    %61 = tpu.concatenate %57, %58, %59, %60 in 0 : vector<1x8x8xf32>, vector<1x8x8xf32>, vector<1x8x8xf32>, vector<1x8x8xf32> -> vector<4x8x8xf32>
    %62 = arith.truncf %61 : vector<4x8x8xf32> to vector<4x8x8xbf16>
    "tpu.trace_start"() <{level = 10 : i32, message = "nqc,nkc->nqk"}> : () -> ()
    %cst_14 = arith.constant dense<0.000000e+00> : vector<4x8x8xf32>
    %63 = tpu.matmul %42, %52, %cst_14 {dimension_numbers = #tpu.dot_dimension_numbers<[2], [2], [1], [1], [0, 0, 0, 1, 1, 1], [0], [0]>} : vector<4x8x8xbf16>, vector<4x8x8xbf16>, vector<4x8x8xf32> -> vector<4x8x8xf32>
    "tpu.trace_stop"() : () -> ()
    %64 = vector.shape_cast %2 : vector<8x8xf32> to vector<1x8x8xf32>
    %65 = vector.broadcast %64 : vector<1x8x8xf32> to vector<4x8x8xf32>
    %66 = arith.addf %63, %65 : vector<4x8x8xf32>
    %cst_15 = arith.constant dense<0xFF800000> : vector<4x8xf32>
    %67 = vector.multi_reduction <maximumf>, %66, %cst_15 [2] : vector<4x8x8xf32> to vector<4x8xf32>
    %68 = vector.shape_cast %67 : vector<4x8xf32> to vector<4x8x1xf32>
    %69 = vector.broadcast %68 : vector<4x8x1xf32> to vector<4x8x8xf32>
    %70 = arith.subf %66, %69 : vector<4x8x8xf32>
    %71 = math.exp %70 : vector<4x8x8xf32>
    %cst_16 = arith.constant dense<0.000000e+00> : vector<4x8xf32>
    %72 = vector.multi_reduction <add>, %71, %cst_16 [2] : vector<4x8x8xf32> to vector<4x8xf32>
    %73 = vector.shape_cast %72 : vector<4x8xf32> to vector<4x8x1xf32>
    %74 = tpu.reciprocal %73 {approx = true} : vector<4x8x1xf32> -> vector<4x8x1xf32>
    %75 = vector.broadcast %74 : vector<4x8x1xf32> to vector<4x8x8xf32>
    %76 = arith.mulf %71, %75 : vector<4x8x8xf32>
    %77 = arith.truncf %76 : vector<4x8x8xf32> to vector<4x8x8xbf16>
    "tpu.trace_start"() <{level = 10 : i32, message = "nqk,nkc->nqc"}> : () -> ()
    %cst_17 = arith.constant dense<0.000000e+00> : vector<4x8x8xf32>
    %78 = tpu.matmul %77, %62, %cst_17 {dimension_numbers = #tpu.dot_dimension_numbers<[2], [1], [1], [2], [0, 0, 0, 1, 1, 2], [0], [0]>} : vector<4x8x8xbf16>, vector<4x8x8xbf16>, vector<4x8x8xf32> -> vector<4x8x8xf32>
    "tpu.trace_stop"() : () -> ()
    %79 = arith.truncf %78 : vector<4x8x8xf32> to vector<4x8x8xbf16>
    %c0_18 = arith.constant 0 : index
    %c0_19 = arith.constant 0 : index
    %c0_20 = arith.constant 0 : index
    %80 = vector.load %arg5[%c0_18, %c0_19, %c0_20] : memref<4x8x32xbf16, #tpu.memory_space<vmem>>, vector<4x8x32xbf16>
    "tpu.trace_start"() <{level = 10 : i32, message = "nqc,nco->nqo"}> : () -> ()
    %cst_21 = arith.constant dense<0.000000e+00> : vector<4x8x32xf32>
    %81 = tpu.matmul %79, %80, %cst_21 {dimension_numbers = #tpu.dot_dimension_numbers<[2], [1], [1], [2], [0, 0, 0, 1, 1, 2], [0], [0]>} : vector<4x8x8xbf16>, vector<4x8x32xbf16>, vector<4x8x32xf32> -> vector<4x8x32xf32>
    "tpu.trace_stop"() : () -> ()
    %cst_22 = arith.constant dense<0.000000e+00> : vector<8x32xf32>
    %82 = vector.multi_reduction <add>, %81, %cst_22 [0] : vector<4x8x32xf32> to vector<8x32xf32>
    %83 = arith.addf %1, %82 : vector<8x32xf32>
    %c0_23 = arith.constant 0 : index
    %c0_24 = arith.constant 0 : index
    %84 = vector.load %arg6[%c0_23, %c0_24] : memref<1x32xf32, #tpu.memory_space<vmem>>, vector<1x32xf32>
    %85 = vector.broadcast %84 : vector<1x32xf32> to vector<8x32xf32>
    %86 = arith.addf %83, %85 : vector<8x32xf32>
    %c2 = arith.constant 2 : index
    %87 = memref.load %arg11[%c2] : memref<4xf32, #tpu.memory_space<smem>>
    %c3 = arith.constant 3 : index
    %88 = memref.load %arg11[%c3] : memref<4xf32, #tpu.memory_space<smem>>
    %cst_25 = arith.constant dense<0.000000e+00> : vector<8xf32>
    %89 = vector.multi_reduction <add>, %86, %cst_25 [1] : vector<8x32xf32> to vector<8xf32>
    %90 = vector.shape_cast %89 : vector<8xf32> to vector<8x1xf32>
    %cst_26 = arith.constant 3.200000e+01 : f32
    %91 = vector.broadcast %cst_26 : f32 to vector<8x1xf32>
    %92 = arith.divf %90, %91 : vector<8x1xf32>
    %93 = arith.mulf %86, %86 : vector<8x32xf32>
    %cst_27 = arith.constant dense<0.000000e+00> : vector<8xf32>
    %94 = vector.multi_reduction <add>, %93, %cst_27 [1] : vector<8x32xf32> to vector<8xf32>
    %95 = vector.shape_cast %94 : vector<8xf32> to vector<8x1xf32>
    %cst_28 = arith.constant 3.200000e+01 : f32
    %96 = vector.broadcast %cst_28 : f32 to vector<8x1xf32>
    %97 = arith.divf %95, %96 : vector<8x1xf32>
    %98 = arith.mulf %92, %92 : vector<8x1xf32>
    %99 = arith.subf %97, %98 : vector<8x1xf32>
    %cst_29 = arith.constant 9.99999974E-6 : f32
    %100 = vector.broadcast %cst_29 : f32 to vector<8x1xf32>
    %101 = arith.addf %99, %100 : vector<8x1xf32>
    %102 = math.rsqrt %101 : vector<8x1xf32>
    %103 = vector.broadcast %92 : vector<8x1xf32> to vector<8x32xf32>
    %104 = arith.subf %86, %103 : vector<8x32xf32>
    %105 = vector.broadcast %87 : f32 to vector<8x32xf32>
    %106 = arith.mulf %105, %104 : vector<8x32xf32>
    %107 = vector.broadcast %102 : vector<8x1xf32> to vector<8x32xf32>
    %108 = arith.mulf %106, %107 : vector<8x32xf32>
    %109 = vector.broadcast %88 : f32 to vector<8x32xf32>
    %110 = arith.addf %108, %109 : vector<8x32xf32>
    %111 = arith.truncf %110 : vector<8x32xf32> to vector<8x32xbf16>
    %c0_30 = arith.constant 0 : index
    %c0_31 = arith.constant 0 : index
    %112 = vector.load %arg7[%c0_30, %c0_31] : memref<32x128xbf16, #tpu.memory_space<vmem>>, vector<32x128xbf16>
    %cst_32 = arith.constant dense<0.000000e+00> : vector<8x128xf32>
    %113 = tpu.matmul %111, %112, %cst_32 {dimension_numbers = #tpu.dot_dimension_numbers<[1], [0], [0], [1], [0, 0, 1, 1], [], []>} : vector<8x32xbf16>, vector<32x128xbf16>, vector<8x128xf32> -> vector<8x128xf32>
    %c0_33 = arith.constant 0 : index
    %c0_34 = arith.constant 0 : index
    %114 = vector.load %arg8[%c0_33, %c0_34] : memref<1x128xf32, #tpu.memory_space<vmem>>, vector<1x128xf32>
    %115 = vector.broadcast %114 : vector<1x128xf32> to vector<8x128xf32>
    %116 = arith.addf %113, %115 : vector<8x128xf32>
    %cst_35 = arith.constant 5.000000e-01 : f32
    %117 = vector.broadcast %cst_35 : f32 to vector<8x128xf32>
    %118 = arith.mulf %116, %117 : vector<8x128xf32>
    %cst_36 = arith.constant 0.707106769 : f32
    %119 = vector.broadcast %cst_36 : f32 to vector<8x128xf32>
    %120 = arith.mulf %116, %119 : vector<8x128xf32>
    %121 = math.erf %120 : vector<8x128xf32>
    %cst_37 = arith.constant 1.000000e+00 : f32
    %122 = vector.broadcast %cst_37 : f32 to vector<8x128xf32>
    %123 = arith.addf %122, %121 : vector<8x128xf32>
    %124 = arith.mulf %118, %123 : vector<8x128xf32>
    %125 = arith.truncf %124 : vector<8x128xf32> to vector<8x128xbf16>
    %c0_38 = arith.constant 0 : index
    %c0_39 = arith.constant 0 : index
    %126 = vector.load %arg9[%c0_38, %c0_39] : memref<128x32xbf16, #tpu.memory_space<vmem>>, vector<128x32xbf16>
    %cst_40 = arith.constant dense<0.000000e+00> : vector<8x32xf32>
    %127 = tpu.matmul %125, %126, %cst_40 {dimension_numbers = #tpu.dot_dimension_numbers<[1], [0], [0], [1], [0, 0, 1, 1], [], []>} : vector<8x128xbf16>, vector<128x32xbf16>, vector<8x32xf32> -> vector<8x32xf32>
    %c0_41 = arith.constant 0 : index
    %c0_42 = arith.constant 0 : index
    %128 = vector.load %arg10[%c0_41, %c0_42] : memref<1x32xf32, #tpu.memory_space<vmem>>, vector<1x32xf32>
    %129 = vector.broadcast %128 : vector<1x32xf32> to vector<8x32xf32>
    %130 = arith.addf %127, %129 : vector<8x32xf32>
    %131 = arith.addf %86, %130 : vector<8x32xf32>
    %c0_43 = arith.constant 0 : index
    %c0_44 = arith.constant 0 : index
    %c0_45 = arith.constant 0 : index
    %132 = vector.load %arg12[%c0_43, %c0_44, %c0_45] : memref<1x8x32xf32, #tpu.memory_space<vmem>>, vector<1x8x32xf32>
    %133 = vector.shape_cast %132 : vector<1x8x32xf32> to vector<8x32xf32>
    %134 = vector.shape_cast %131 : vector<8x32xf32> to vector<1x8x32xf32>
    tpu.vector_store %arg12[%c0_43, %c0_44, %c0_45], %134 {strides = array<i32>} : memref<1x8x32xf32, #tpu.memory_space<vmem>>, vector<1x8x32xf32>,
    return
  }
  func.func @transform_0(%arg0: i32) -> (i32, i32, i32) {
    %c0_i32 = arith.constant 0 : i32
    %c0_i32_0 = arith.constant 0 : i32
    %c0_i32_1 = arith.constant 0 : i32
    return %arg0, %c0_i32, %c0_i32_0 : i32, i32, i32
  }
  func.func @transform_1(%arg0: i32) -> (i32, i32) {
    %c0_i32 = arith.constant 0 : i32
    %c0_i32_0 = arith.constant 0 : i32
    %c0_i32_1 = arith.constant 0 : i32
    return %c0_i32, %c0_i32_0 : i32, i32
  }
  func.func @transform_2(%arg0: i32) -> (i32, i32) {
    %c0_i32 = arith.constant 0 : i32
    %c0_i32_0 = arith.constant 0 : i32
    %c0_i32_1 = arith.constant 0 : i32
    return %c0_i32, %c0_i32_0 : i32, i32
  }
  func.func @transform_3(%arg0: i32) -> (i32, i32) {
    %c0_i32 = arith.constant 0 : i32
    %c0_i32_0 = arith.constant 0 : i32
    %c0_i32_1 = arith.constant 0 : i32
    return %c0_i32, %c0_i32_0 : i32, i32
  }
  func.func @transform_4(%arg0: i32) -> (i32, i32, i32) {
    %c0_i32 = arith.constant 0 : i32
    %c0_i32_0 = arith.constant 0 : i32
    %c0_i32_1 = arith.constant 0 : i32
    %c0_i32_2 = arith.constant 0 : i32
    return %c0_i32, %c0_i32_0, %c0_i32_1 : i32, i32, i32
  }
  func.func @transform_5(%arg0: i32) -> (i32, i32) {
    %c0_i32 = arith.constant 0 : i32
    %c0_i32_0 = arith.constant 0 : i32
    %c0_i32_1 = arith.constant 0 : i32
    return %c0_i32, %c0_i32_0 : i32, i32
  }
  func.func @transform_6(%arg0: i32) -> (i32, i32) {
    %c0_i32 = arith.constant 0 : i32
    %c0_i32_0 = arith.constant 0 : i32
    %c0_i32_1 = arith.constant 0 : i32
    return %c0_i32, %c0_i32_0 : i32, i32
  }
  func.func @transform_7(%arg0: i32) -> (i32, i32) {
    %c0_i32 = arith.constant 0 : i32
    %c0_i32_0 = arith.constant 0 : i32
    %c0_i32_1 = arith.constant 0 : i32
    return %c0_i32, %c0_i32_0 : i32, i32
  }
  func.func @transform_8(%arg0: i32) -> (i32, i32) {
    %c0_i32 = arith.constant 0 : i32
    %c0_i32_0 = arith.constant 0 : i32
    %c0_i32_1 = arith.constant 0 : i32
    return %c0_i32, %c0_i32_0 : i32, i32
  }
  func.func @transform_9(%arg0: i32) -> (i32, i32) {
    %c0_i32 = arith.constant 0 : i32
    %c0_i32_0 = arith.constant 0 : i32
    %c0_i32_1 = arith.constant 0 : i32
    return %c0_i32, %c0_i32_0 : i32, i32
  }
  func.func @transform_10(%arg0: i32) -> i32 {
    %c0_i32 = arith.constant 0 : i32
    %c0_i32_0 = arith.constant 0 : i32
    return %c0_i32 : i32
  }
  func.func @transform_11(%arg0: i32) -> (i32, i32, i32) {
    %c0_i32 = arith.constant 0 : i32
    %c0_i32_0 = arith.constant 0 : i32
    %c0_i32_1 = arith.constant 0 : i32
    return %arg0, %c0_i32, %c0_i32_0 : i32, i32, i32
  }
}

</mosaic_0001>

<llo_original>
// kernel: layer_forward.1
$region0: #{layer_forward.1}
  #allocation0 [shape = 'u32[]', space=smem, size = 0x4, offset = 0x4, fixed_abs, tag = 'smem constant byte address 0x4 - core index']
  #allocation1 [shape = 'u32[72,128]{1,0:T(1,128)}', space=vmem, size = 0x9000, scoped, tag = 'internal scratch']
  %s0 = inlined_call_operand.vmem [shape: f32[2,8,32], index: 0, kind: input, shape index: {}]
  %s1 = inlined_call_operand.vmem [shape: f32[8,8], index: 1, kind: input, shape index: {}]
  %s2 = inlined_call_operand.vmem [shape: bf16[32,96], index: 2, kind: input, shape index: {}]
  %s3 = inlined_call_operand.vmem [shape: f32[1,96], index: 3, kind: input, shape index: {}]
  %s4 = inlined_call_operand.vmem [shape: bf16[4,8,32], index: 4, kind: input, shape index: {}]
  %s5 = inlined_call_operand.vmem [shape: f32[1,32], index: 5, kind: input, shape index: {}]
  %s6 = inlined_call_operand.vmem [shape: bf16[32,128], index: 6, kind: input, shape index: {}]
  %s7 = inlined_call_operand.vmem [shape: f32[1,128], index: 7, kind: input, shape index: {}]
  %s8 = inlined_call_operand.vmem [shape: bf16[128,32], index: 8, kind: input, shape index: {}]
  %s9 = inlined_call_operand.vmem [shape: f32[1,32], index: 9, kind: input, shape index: {}]
  %s10 = inlined_call_operand.vmem [shape: f32[4], index: 10, kind: input, shape index: {}]
  %s11 = inlined_call_operand.hbm [shape: f32[2,8,32], index: 11, kind: output, shape index: {}]
  %s12 = sld [smem:[#allocation0]]
  $region81: #{layer_forward.1} parent=0
    _
  %s14 = ssub.s32 1, %s12
  %s15 = scalar_select 0, %s14, %s12
  $region1: #{layer_forward.1} parent=0
    #allocation2 [shape = 'u8[512]{0}', space=smem, size = 0x200, scoped, tag = 'input window, operand 10, single buffered']
    #allocation3 [shape = 's32[2]{0}', space=sflag, size = 0x8, scoped, tag = 'scoped memory for layer_forward.1']
    #allocation4 [shape = 's32[2]{0}', space=sflag, size = 0x8, scoped, tag = 'scoped memory for layer_forward.1']
    #allocation5 [shape = 'u8[8192]{0}', space=vmem, size = 0x2000, scoped, tag = 'output window, operand 0']
    %16 = vsyncpa [#allocation4], 0
    %17 = vsyncpa [#allocation3], 0
    %s18 = scalar_lea.sflag [#allocation3], 1
    %19 = vsyncpa %s18, 0
    loop: start=0, step=1, limit=4
    $region2: #{layer_forward.1} parent=1 // loop_pre_header
      _
    $region3: #{layer_forward.1} parent=1 // loop_header
      %s21 = sphi 0, %s25
      %p22 = scmp.ge.s32.totalorder %s21, 4
      %s31 = sphi 0, %s33
      %s34 = sphi 0, %s31
      %s35 = sphi 0, %s34
      %s51 = sphi 0, %s35
      %s55 = sphi 0, %s55
      %s57 = sphi 0, %s55
      %s58 = sphi 0, %s57
      %s72 = sphi 0, %s58
      %s76 = sphi 0, %s76
      %s78 = sphi 0, %s76
      %s79 = sphi 0, %s78
      %s93 = sphi 0, %s79
      %s97 = sphi 0, %s97
      %s99 = sphi 0, %s97
      %s100 = sphi 0, %s99
      %s114 = sphi 0, %s100
      %s118 = sphi 0, %s118
      %s120 = sphi 0, %s118
      %s121 = sphi 0, %s120
      %s135 = sphi 0, %s121
      %s139 = sphi 0, %s139
      %s141 = sphi 0, %s139
      %s142 = sphi 0, %s141
      %s156 = sphi 0, %s142
      %s160 = sphi 0, %s160
      %s162 = sphi 0, %s160
      %s163 = sphi 0, %s162
      %s177 = sphi 0, %s163
      %s181 = sphi 0, %s181
      %s183 = sphi 0, %s181
      %s184 = sphi 0, %s183
      %s198 = sphi 0, %s184
      %s202 = sphi 0, %s202
      %s204 = sphi 0, %s202
      %s205 = sphi 0, %s204
      %s219 = sphi 0, %s205
      %s223 = sphi 0, %s223
      %s225 = sphi 0, %s223
      %s226 = sphi 0, %s225
      %s240 = sphi 0, %s226
      %s244 = sphi 0, %s244
      %s246 = sphi 0, %s244
      %s247 = sphi 0, %s246
      %s261 = sphi 0, %s247
      %s267 = sphi 0, %s269
      %s270 = sphi 0, %s267
      %s271 = sphi 0, %s270
      %s287 = sphi 0, %s271
    $region4: #{layer_forward.1} parent=1 // loop_header_branch
      %24 = sbr.rel (%p22) target = $region8
    $region5: #{layer_forward.1} parent=1 // loop_body
      %s26 = ssub.s32 %s21, 1
      %s27 = ssub.s32 %s21, 2
      %s28 = sadd.s32 %s21, 1
      %s29 = ssub.s32 %s21, %s28
      %p30 = scmp.eq.s32.totalorder %s29, 0
      %s32 = sadd.s32 %s31, 1
      %s33 = scalar_select %p30, %s31, %s32
      %p36 = pneg %p30
      %p37 = scmp.eq.s32.totalorder %s21, 1
      %p38 = por %p36, %p37
      %p39 = scmp.ne.s32.totalorder %s31, %s34
      %p40 = scmp.eq.s32.totalorder %s21, 0
      %p41 = por %p39, %p40
      %p42 = scmp.ne.s32.totalorder %s31, %s34
      %p43 = scmp.eq.s32.totalorder %s26, 1
      %p44 = por %p42, %p43
      %p45 = scmp.ne.s32.totalorder %s34, %s35
      %p46 = scmp.eq.s32.totalorder %s26, 0
      %p47 = por %p45, %p46
      %p48 = scmp.ne.s32.totalorder %s34, %s35
      %p49 = scmp.eq.s32.totalorder %s27, 1
      %p50 = por %p48, %p49
      %p52 = scmp.ne.s32.totalorder %s35, %s51
      %p53 = scmp.eq.s32.totalorder %s27, 0
      %p54 = por %p52, %p53
      %s56 = sadd.s32 %s55, 1
      %p59 = scmp.eq.s32.totalorder %s21, 1
      %p60 = scmp.ne.s32.totalorder %s55, %s57
      %p61 = scmp.eq.s32.totalorder %s21, 0
      %p62 = por %p60, %p61
      %p63 = scmp.ne.s32.totalorder %s55, %s57
      %p64 = scmp.eq.s32.totalorder %s26, 1
      %p65 = por %p63, %p64
      %p66 = scmp.ne.s32.totalorder %s57, %s58
      %p67 = scmp.eq.s32.totalorder %s26, 0
      %p68 = por %p66, %p67
      %p69 = scmp.ne.s32.totalorder %s57, %s58
      %p70 = scmp.eq.s32.totalorder %s27, 1
      %p71 = por %p69, %p70
      %p73 = scmp.ne.s32.totalorder %s58, %s72
      %p74 = scmp.eq.s32.totalorder %s27, 0
      %p75 = por %p73, %p74
      %s77 = sadd.s32 %s76, 1
      %p80 = scmp.eq.s32.totalorder %s21, 1
      %p81 = scmp.ne.s32.totalorder %s76, %s78
      %p82 = scmp.eq.s32.totalorder %s21, 0
      %p83 = por %p81, %p82
      %p84 = scmp.ne.s32.totalorder %s76, %s78
      %p85 = scmp.eq.s32.totalorder %s26, 1
      %p86 = por %p84, %p85
      %p87 = scmp.ne.s32.totalorder %s78, %s79
      %p88 = scmp.eq.s32.totalorder %s26, 0
      %p89 = por %p87, %p88
      %p90 = scmp.ne.s32.totalorder %s78, %s79
      %p91 = scmp.eq.s32.totalorder %s27, 1
      %p92 = por %p90, %p91
      %p94 = scmp.ne.s32.totalorder %s79, %s93
      %p95 = scmp.eq.s32.totalorder %s27, 0
      %p96 = por %p94, %p95
      %s98 = sadd.s32 %s97, 1
      %p101 = scmp.eq.s32.totalorder %s21, 1
      %p102 = scmp.ne.s32.totalorder %s97, %s99
      %p103 = scmp.eq.s32.totalorder %s21, 0
      %p104 = por %p102, %p103
      %p105 = scmp.ne.s32.totalorder %s97, %s99
      %p106 = scmp.eq.s32.totalorder %s26, 1
      %p107 = por %p105, %p106
      %p108 = scmp.ne.s32.totalorder %s99, %s100
      %p109 = scmp.eq.s32.totalorder %s26, 0
      %p110 = por %p108, %p109
      %p111 = scmp.ne.s32.totalorder %s99, %s100
      %p112 = scmp.eq.s32.totalorder %s27, 1
      %p113 = por %p111, %p112
      %p115 = scmp.ne.s32.totalorder %s100, %s114
      %p116 = scmp.eq.s32.totalorder %s27, 0
      %p117 = por %p115, %p116
      %s119 = sadd.s32 %s118, 1
      %p122 = scmp.eq.s32.totalorder %s21, 1
      %p123 = scmp.ne.s32.totalorder %s118, %s120
      %p124 = scmp.eq.s32.totalorder %s21, 0
      %p125 = por %p123, %p124
      %p126 = scmp.ne.s32.totalorder %s118, %s120
      %p127 = scmp.eq.s32.totalorder %s26, 1
      %p128 = por %p126, %p127
      %p129 = scmp.ne.s32.totalorder %s120, %s121
      %p130 = scmp.eq.s32.totalorder %s26, 0
      %p131 = por %p129, %p130
      %p132 = scmp.ne.s32.totalorder %s120, %s121
      %p133 = scmp.eq.s32.totalorder %s27, 1
      %p134 = por %p132, %p133
      %p136 = scmp.ne.s32.totalorder %s121, %s135
      %p137 = scmp.eq.s32.totalorder %s27, 0
      %p138 = por %p136, %p137
      %s140 = sadd.s32 %s139, 1
      %p143 = scmp.eq.s32.totalorder %s21, 1
      %p144 = scmp.ne.s32.totalorder %s139, %s141
      %p145 = scmp.eq.s32.totalorder %s21, 0
      %p146 = por %p144, %p145
      %p147 = scmp.ne.s32.totalorder %s139, %s141
      %p148 = scmp.eq.s32.totalorder %s26, 1
      %p149 = por %p147, %p148
      %p150 = scmp.ne.s32.totalorder %s141, %s142
      %p151 = scmp.eq.s32.totalorder %s26, 0
      %p152 = por %p150, %p151
      %p153 = scmp.ne.s32.totalorder %s141, %s142
      %p154 = scmp.eq.s32.totalorder %s27, 1
      %p155 = por %p153, %p154
      %p157 = scmp.ne.s32.totalorder %s142, %s156
      %p158 = scmp.eq.s32.totalorder %s27, 0
      %p159 = por %p157, %p158
      %s161 = sadd.s32 %s160, 1
      %p164 = scmp.eq.s32.totalorder %s21, 1
      %p165 = scmp.ne.s32.totalorder %s160, %s162
      %p166 = scmp.eq.s32.totalorder %s21, 0
      %p167 = por %p165, %p166
      %p168 = scmp.ne.s32.totalorder %s160, %s162
      %p169 = scmp.eq.s32.totalorder %s26, 1
      %p170 = por %p168, %p169
      %p171 = scmp.ne.s32.totalorder %s162, %s163
      %p172 = scmp.eq.s32.totalorder %s26, 0
      %p173 = por %p171, %p172
      %p174 = scmp.ne.s32.totalorder %s162, %s163
      %p175 = scmp.eq.s32.totalorder %s27, 1
      %p176 = por %p174, %p175
      %p178 = scmp.ne.s32.totalorder %s163, %s177
      %p179 = scmp.eq.s32.totalorder %s27, 0
      %p180 = por %p178, %p179
      %s182 = sadd.s32 %s181, 1
      %p185 = scmp.eq.s32.totalorder %s21, 1
      %p186 = scmp.ne.s32.totalorder %s181, %s183
      %p187 = scmp.eq.s32.totalorder %s21, 0
      %p188 = por %p186, %p187
      %p189 = scmp.ne.s32.totalorder %s181, %s183
      %p190 = scmp.eq.s32.totalorder %s26, 1
      %p191 = por %p189, %p190
      %p192 = scmp.ne.s32.totalorder %s183, %s184
      %p193 = scmp.eq.s32.totalorder %s26, 0
      %p194 = por %p192, %p193
      %p195 = scmp.ne.s32.totalorder %s183, %s184
      %p196 = scmp.eq.s32.totalorder %s27, 1
      %p197 = por %p195, %p196
      %p199 = scmp.ne.s32.totalorder %s184, %s198
      %p200 = scmp.eq.s32.totalorder %s27, 0
      %p201 = por %p199, %p200
      %s203 = sadd.s32 %s202, 1
      %p206 = scmp.eq.s32.totalorder %s21, 1
      %p207 = scmp.ne.s32.totalorder %s202, %s204
      %p208 = scmp.eq.s32.totalorder %s21, 0
      %p209 = por %p207, %p208
      %p210 = scmp.ne.s32.totalorder %s202, %s204
      %p211 = scmp.eq.s32.totalorder %s26, 1
      %p212 = por %p210, %p211
      %p213 = scmp.ne.s32.totalorder %s204, %s205
      %p214 = scmp.eq.s32.totalorder %s26, 0
      %p215 = por %p213, %p214
      %p216 = scmp.ne.s32.totalorder %s204, %s205
      %p217 = scmp.eq.s32.totalorder %s27, 1
      %p218 = por %p216, %p217
      %p220 = scmp.ne.s32.totalorder %s205, %s219
      %p221 = scmp.eq.s32.totalorder %s27, 0
      %p222 = por %p220, %p221
      %s224 = sadd.s32 %s223, 1
      %p227 = scmp.eq.s32.totalorder %s21, 1
      %p228 = scmp.ne.s32.totalorder %s223, %s225
      %p229 = scmp.eq.s32.totalorder %s21, 0
      %p230 = por %p228, %p229
      %p231 = scmp.ne.s32.totalorder %s223, %s225
      %p232 = scmp.eq.s32.totalorder %s26, 1
      %p233 = por %p231, %p232
      %p234 = scmp.ne.s32.totalorder %s225, %s226
      %p235 = scmp.eq.s32.totalorder %s26, 0
      %p236 = por %p234, %p235
      %p237 = scmp.ne.s32.totalorder %s225, %s226
      %p238 = scmp.eq.s32.totalorder %s27, 1
      %p239 = por %p237, %p238
      %p241 = scmp.ne.s32.totalorder %s226, %s240
      %p242 = scmp.eq.s32.totalorder %s27, 0
      %p243 = por %p241, %p242
      %s245 = sadd.s32 %s244, 1
      %p248 = scmp.eq.s32.totalorder %s21, 1
      %p249 = scmp.ne.s32.totalorder %s244, %s246
      %p250 = scmp.eq.s32.totalorder %s21, 0
      %p251 = por %p249, %p250
      %p252 = scmp.ne.s32.totalorder %s244, %s246
      %p253 = scmp.eq.s32.totalorder %s26, 1
      %p254 = por %p252, %p253
      %p255 = scmp.ne.s32.totalorder %s246, %s247
      %p256 = scmp.eq.s32.totalorder %s26, 0
      %p257 = por %p255, %p256
      %p258 = scmp.ne.s32.totalorder %s246, %s247
      %p259 = scmp.eq.s32.totalorder %s27, 1
      %p260 = por %p258, %p259
      %p262 = scmp.ne.s32.totalorder %s247, %s261
      %p263 = scmp.eq.s32.totalorder %s27, 0
      %p264 = por %p262, %p263
      %s265 = ssub.s32 %s21, %s28
      %p266 = scmp.eq.s32.totalorder %s265, 0
      %s268 = sadd.s32 %s267, 1
      %s269 = scalar_select %p266, %s267, %s268
      %p272 = pneg %p266
      %p273 = scmp.eq.s32.totalorder %s21, 1
      %p274 = por %p272, %p273
      %p275 = scmp.ne.s32.totalorder %s267, %s270
      %p276 = scmp.eq.s32.totalorder %s21, 0
      %p277 = por %p275, %p276
      %p278 = scmp.ne.s32.totalorder %s267, %s270
      %p279 = scmp.eq.s32.totalorder %s26, 1
      %p280 = por %p278, %p279
      %p281 = scmp.ne.s32.totalorder %s270, %s271
      %p282 = scmp.eq.s32.totalorder %s26, 0
      %p283 = por %p281, %p282
      %p284 = scmp.ne.s32.totalorder %s270, %s271
      %p285 = scmp.eq.s32.totalorder %s27, 1
      %p286 = por %p284, %p285
      %p288 = scmp.ne.s32.totalorder %s271, %s287
      %p289 = scmp.eq.s32.totalorder %s27, 0
      %p290 = por %p288, %p289
      %p291 = scmp.le.s32.totalorder 1, %s21
      %p292 = scmp.lt.s32.totalorder %s21, 3
      %p293 = pnand %p291, %p292
      %p294 = pneg %p293
      // Predicated region
      $region9: #{layer_forward.1} parent=5 // pred_check
        _
      $region10: #{layer_forward.1} parent=5 // pred_check_branch
        %296 = sbr.rel (%p293) target = $region12
      $region11: #{layer_forward.1} parent=5 // pred_region
        %s297 = ssub.s32 %s21, 1
        // Predicated region
        $region13: #{layer_forward.1} parent=11 // pred_check
          %p298 = pneg %p68
        $region14: #{layer_forward.1} parent=11 // pred_check_branch
          %300 = sbr.rel (%p298) target = $region16
        $region15: #{layer_forward.1} parent=11 // pred_region
          _
        $region16: #{layer_forward.1} parent=11 // pred_fallthru
          _
        // Predicated region
        $region17: #{layer_forward.1} parent=11 // pred_check
          %p301 = pneg %p89
        $region18: #{layer_forward.1} parent=11 // pred_check_branch
          %303 = sbr.rel (%p301) target = $region20
        $region19: #{layer_forward.1} parent=11 // pred_region
          _
        $region20: #{layer_forward.1} parent=11 // pred_fallthru
          _
        // Predicated region
        $region21: #{layer_forward.1} parent=11 // pred_check
          %p304 = pneg %p110
        $region22: #{layer_forward.1} parent=11 // pred_check_branch
          %306 = sbr.rel (%p304) target = $region24
        $region23: #{layer_forward.1} parent=11 // pred_region
          _
        $region24: #{layer_forward.1} parent=11 // pred_fallthru
          _
        // Predicated region
        $region25: #{layer_forward.1} parent=11 // pred_check
          %p307 = pneg %p131
        $region26: #{layer_forward.1} parent=11 // pred_check_branch
          %309 = sbr.rel (%p307) target = $region28
        $region27: #{layer_forward.1} parent=11 // pred_region
          _
        $region28: #{layer_forward.1} parent=11 // pred_fallthru
          _
        // Predicated region
        $region29: #{layer_forward.1} parent=11 // pred_check
          %p310 = pneg %p152
        $region30: #{layer_forward.1} parent=11 // pred_check_branch
          %312 = sbr.rel (%p310) target = $region32
        $region31: #{layer_forward.1} parent=11 // pred_region
          _
        $region32: #{layer_forward.1} parent=11 // pred_fallthru
          _
        // Predicated region
        $region33: #{layer_forward.1} parent=11 // pred_check
          %p313 = pneg %p173
        $region34: #{layer_forward.1} parent=11 // pred_check_branch
          %315 = sbr.rel (%p313) target = $region36
        $region35: #{layer_forward.1} parent=11 // pred_region
          _
        $region36: #{layer_forward.1} parent=11 // pred_fallthru
          _
        // Predicated region
        $region37: #{layer_forward.1} parent=11 // pred_check
          %p316 = pneg %p194
        $region38: #{layer_forward.1} parent=11 // pred_check_branch
          %318 = sbr.rel (%p316) target = $region40
        $region39: #{layer_forward.1} parent=11 // pred_region
          _
        $region40: #{layer_forward.1} parent=11 // pred_fallthru
          _
        // Predicated region
        $region41: #{layer_forward.1} parent=11 // pred_check
          %p319 = pneg %p215
        $region42: #{layer_forward.1} parent=11 // pred_check_branch
          %321 = sbr.rel (%p319) target = $region44
        $region43: #{layer_forward.1} parent=11 // pred_region
          _
        $region44: #{layer_forward.1} parent=11 // pred_fallthru
          _
        // Predicated region
        $region45: #{layer_forward.1} parent=11 // pred_check
          %p322 = pneg %p236
        $region46: #{layer_forward.1} parent=11 // pred_check_branch
          %324 = sbr.rel (%p322) target = $region48
        $region47: #{layer_forward.1} parent=11 // pred_region
          _
        $region48: #{layer_forward.1} parent=11 // pred_fallthru
          _
        // Predicated region
        $region49: #{layer_forward.1} parent=11 // pred_check
          %p325 = pneg %p257
        $region50: #{layer_forward.1} parent=11 // pred_check_branch
          %327 = sbr.rel (%p325) target = $region52
        $region51: #{layer_forward.1} parent=11 // pred_region
          %329 = vsyncadd [#allocation4], 0
          %s331 = sshll.u32 %s10, 4
          %s332 = int_to_ptr.vmem [resolvable:$true] %s331
          %334 = dma.vmem_to_smem %s332, 16, [#allocation2], [#allocation4]
        $region52: #{layer_forward.1} parent=11 // pred_fallthru
          _
      $region12: #{layer_forward.1} parent=5 // pred_fallthru
        _
      %p335 = scmp.lt.s32.totalorder %s21, 2
      // Predicated region
      $region53: #{layer_forward.1} parent=5 // pred_check
        %p336 = pneg %p335
      $region54: #{layer_forward.1} parent=5 // pred_check_branch
        %338 = sbr.rel (%p336) target = $region56
      $region55: #{layer_forward.1} parent=5 // pred_region
        // Predicated region
        $region57: #{layer_forward.1} parent=55 // pred_check
          %p339 = pneg %p41
        $region58: #{layer_forward.1} parent=55 // pred_check_branch
          %341 = sbr.rel (%p339) target = $region60
        $region59: #{layer_forward.1} parent=55 // pred_region
          %p342 = scmp.lt.s32.totalorder %s21, 1
          %s343 = scalar_select %p342, %s21, 1
          %s344 = smul.addr %s343, 8
          %s345 = scalar_lea.vmem %s0, %s344
        $region60: #{layer_forward.1} parent=55 // pred_fallthru
          _
      $region56: #{layer_forward.1} parent=5 // pred_fallthru
        _
      %p346 = scmp.le.s32.totalorder 1, %s21
      %p347 = scmp.lt.s32.totalorder %s21, 3
      %p348 = pnand %p346, %p347
      %p349 = pneg %p348
      // Predicated region
      $region61: #{layer_forward.1} parent=5 // pred_check
        _
      $region62: #{layer_forward.1} parent=5 // pred_check_branch
        %351 = sbr.rel (%p348) target = $region64
      $region63: #{layer_forward.1} parent=5 // pred_region
        %s352 = ssub.s32 %s21, 1
        // Predicated region
        $region65: #{layer_forward.1} parent=63 // pred_check
          %p353 = pneg %p257
        $region66: #{layer_forward.1} parent=63 // pred_check_branch
          %355 = sbr.rel (%p353) target = $region68
        $region67: #{layer_forward.1} parent=63 // pred_region
          %357 = dma.done [#allocation4], 16
        $region68: #{layer_forward.1} parent=63 // pred_fallthru
          _
        %358 = sfence
        %p359 = scmp.lt.s32.totalorder %s26, 1
        %s360 = scalar_select %p359, %s26, 1
        %s361 = smul.addr %s360, 8
        %s362 = scalar_lea.vmem %s0, %s361
        %p363 = pneg %p47
        %p364 = pneg %p44
        %p365 = pneg %p68
        %p366 = pneg %p65
        %p367 = pneg %p89
        %p368 = pneg %p86
        %p369 = pneg %p110
        %p370 = pneg %p107
        %p371 = pneg %p131
        %p372 = pneg %p128
        %p373 = pneg %p152
        %p374 = pneg %p149
        %p375 = pneg %p173
        %p376 = pneg %p170
        %p377 = pneg %p194
        %p378 = pneg %p191
        %p379 = pneg %p215
        %p380 = pneg %p212
        %p381 = pneg %p236
        %p382 = pneg %p233
        %p383 = pneg %p257
        %p384 = pneg %p254
        %p385 = pneg %p283
        %p386 = pneg %p280
        %s387 = sand.u32 %s270, 1
        %s388 = scalar_lea.sflag [#allocation3], %s387
        %s389 = sand.u32 %s270, 1
        %s390 = smul.addr %s389, 8
        %s391 = scalar_lea.vmem [#allocation5], %s390
        %p392 = scmp.lt.s32.totalorder %s26, 1
        %s393 = scalar_select %p392, %s26, 1
        %s394 = smul.addr %s393, 8
        %s395 = scalar_lea.vmem %s0, %s394
        %v397 = vld [vmem:[%s395] sm:$0xff]
        %v398 = vld [vmem:[%s1] sm:$0xff]
        %s399 = sld [smem:[#allocation2]]
        %s400 = sld [smem:[#allocation2 + $0x1]]
        %vm401 = vcmask 261120
        %v402 = vsel %vm401, %v397, 0.0
        %403 = vadd.xlane.f32.xlu0 %v402
        %v404 = vpop.xlane.xlu0 %403
        %v405 = vrcp.pop 32.0
        %v406 = vmul.f32 32.0, %v405
        %v407 = vsub.f32 1.0, %v406
        %v408 = vmul.f32 %v405, %v407
        %v409 = vadd.f32 %v405, %v408
        %vm410 = vweird.f32 %v405
        %v411 = vsel %vm410, %v405, %v409
        %v412 = vmul.f32 %v404, %v411
        %v413 = vmul.f32 %v397, %v397
        %v414 = vsel %vm401, %v413, 0.0
        %415 = vadd.xlane.f32.xlu0 %v414
        %v416 = vpop.xlane.xlu0 %415
        %v417 = vmul.f32 %v416, %v411
        %v418 = vmul.f32 %v412, %v412
        %v419 = vsub.f32 %v417, %v418
        %v420 = vadd.f32 %v419, 1e-05
        %v421 = vrsqrt.pop %v420
        %v422 = vmul.f32 %v421, %v420
        %v423 = vmul.f32 %v422, %v421
        %v424 = vmul.f32 0.5, %v423
        %v425 = vsub.f32 1.5, %v424
        %v426 = vmul.f32 %v421, %v425
        %vm427 = vweird.f32 %v420
        %vm428 = vweird.f32 %v421
        %vm429 = vmor %vm427, %vm428
        %v430 = vsel %vm429, %v421, %v426
        %v431 = vsub.f32 %v397, %v412
        %v432 = vstv %s399
        %v433 = vmul.f32 %v432, %v431
        %v434 = vmul.f32 %v433, %v430
        %v435 = vstv %s400
        %v436 = vadd.f32 %v434, %v435
        %v437 = vpack.c.bf16 %v436, %v436
        %v438 = vld [vmem:[%s2] sm:$0xf]
        %v439 = vld [vmem:[%s2 + $0x4] sm:$0xf]
        %v440 = vld [vmem:[%s2 + $0x8] sm:$0xf]
        %v441 = vld [vmem:[%s2 + $0xc] sm:$0xf]
        %v442 = vld [vmem:[%s3] sm:$0x1]
        %v444 = vperm.slane %v442, 0
        %v450 = vunpack.c.l.b16 %v438
        %v451 = vunpack.c.l.b16 %v439
        %v452 = vunpack.c.l.b16 %v440
        %v453 = vunpack.c.l.b16 %v441
        %v454 = vpack.c.b16 %v451, %v450
        %v455 = vpack.c.b16 %v453, %v452
        %v459 = vsel %vm401, %v437, 0
        %461 = vmatpush.bf16.msra.mxu0 0
        %462 = vmatpush.bf16.msra.mxu0 0
        %463 = vmatpush.bf16.msra.mxu0 0
        %464 = vmatpush.bf16.msra.mxu0 0
        %465 = vmatpush.bf16.msra.mxu0 0
        %466 = vmatpush.bf16.msra.mxu0 0
        %467 = vmatpush.bf16.msra.mxu0 %v455
        %468 = vmatpush.bf16.msra.mxu0 %v454
        %469 = vmatmul.bf16.gmra.mxu0 %v459
        %v470 = vpop.f32.mrf.mxu0
        %v471 = vadd.f32 %v444, %v470
        %v472 = vpop.f32.mrf.mxu0
        %473 = vdwg.mxu0
        %475 = vrot.lane.b32.xlu0 %v471, 120
        %v476 = vpop.permute.xlu0 %475
        %478 = vrot.lane.b32.xlu0 %v471, 112
        %v479 = vpop.permute.xlu0 %478
        %481 = vrot.lane.b32.xlu0 %v471, 104
        %v482 = vpop.permute.xlu0 %481
        %v484 = vpack.c.bf16 %v471, %v471
        %v485 = vpack.c.bf16 %v476, %v476
        %v486 = vpack.c.bf16 %v479, %v479
        %v487 = vpack.c.bf16 %v482, %v482
        %v489 = vunpack.c.l.b16 %v484
        %v490 = vpack.c.b16 %v489, %v489
        %491 = vrot.lane.b32.xlu0 %v490, 96
        %v492 = vpop.permute.xlu0 %491
        %vm493 = vcmask 64512
        %v495 = vsel %vm493, %v484, 0
        %v498 = vsel %vm493, %v492, 0
        %500 = vmatpush.bf16.xpose.msra.mxu0 0
        %501 = vmatpush.bf16.xpose.msra.mxu0 0
        %502 = vmatpush.bf16.xpose.msra.mxu0 0
        %503 = vmatpush.bf16.xpose.msra.mxu0 0
        %504 = vmatpush.bf16.xpose.msra.mxu0 0
        %505 = vmatpush.bf16.xpose.msra.mxu0 0
        %506 = vmatpush.bf16.xpose.msra.mxu0 0
        %507 = vmatpush.bf16.xpose.msra.mxu0 %v498
        %508 = vmatmul.bf16.gmra.mxu0 %v495
        %v509 = vpop.f32.mrf.mxu0
        %v510 = vadd.f32 %v398, %v509
        %v511 = vpop.f32.mrf.mxu0
        %512 = vdwg.mxu0
        %v514 = vunpack.c.l.b16 %v485
        %v515 = vpack.c.b16 %v514, %v514
        %516 = vrot.lane.b32.xlu0 %v515, 96
        %v517 = vpop.permute.xlu0 %516
        %v519 = vsel %vm493, %v485, 0
        %v522 = vsel %vm493, %v517, 0
        %524 = vmatpush.bf16.xpose.msra.mxu0 0
        %525 = vmatpush.bf16.xpose.msra.mxu0 0
        %526 = vmatpush.bf16.xpose.msra.mxu0 0
        %527 = vmatpush.bf16.xpose.msra.mxu0 0
        %528 = vmatpush.bf16.xpose.msra.mxu0 0
        %529 = vmatpush.bf16.xpose.msra.mxu0 0
        %530 = vmatpush.bf16.xpose.msra.mxu0 0
        %531 = vmatpush.bf16.xpose.msra.mxu0 %v522
        %532 = vmatmul.bf16.gmra.mxu0 %v519
        %v533 = vpop.f32.mrf.mxu0
        %v534 = vadd.f32 %v398, %v533
        %v535 = vpop.f32.mrf.mxu0
        %536 = vdwg.mxu0
        %v538 = vunpack.c.l.b16 %v486
        %v539 = vpack.c.b16 %v538, %v538
        %540 = vrot.lane.b32.xlu0 %v539, 96
        %v541 = vpop.permute.xlu0 %540
        %v543 = vsel %vm493, %v486, 0
        %v546 = vsel %vm493, %v541, 0
        %548 = vmatpush.bf16.xpose.msra.mxu0 0
        %549 = vmatpush.bf16.xpose.msra.mxu0 0
        %550 = vmatpush.bf16.xpose.msra.mxu0 0
        %551 = vmatpush.bf16.xpose.msra.mxu0 0
        %552 = vmatpush.bf16.xpose.msra.mxu0 0
        %553 = vmatpush.bf16.xpose.msra.mxu0 0
        %554 = vmatpush.bf16.xpose.msra.mxu0 0
        %555 = vmatpush.bf16.xpose.msra.mxu0 %v546
        %556 = vmatmul.bf16.gmra.mxu0 %v543
        %v557 = vpop.f32.mrf.mxu0
        %v558 = vadd.f32 %v398, %v557
        %v559 = vpop.f32.mrf.mxu0
        %560 = vdwg.mxu0
        %v562 = vunpack.c.l.b16 %v487
        %v563 = vpack.c.b16 %v562, %v562
        %564 = vrot.lane.b32.xlu0 %v563, 96
        %v565 = vpop.permute.xlu0 %564
        %v567 = vsel %vm493, %v487, 0
        %v570 = vsel %vm493, %v565, 0
        %572 = vmatpush.bf16.xpose.msra.mxu0 0
        %573 = vmatpush.bf16.xpose.msra.mxu0 0
        %574 = vmatpush.bf16.xpose.msra.mxu0 0
        %575 = vmatpush.bf16.xpose.msra.mxu0 0
        %576 = vmatpush.bf16.xpose.msra.mxu0 0
        %577 = vmatpush.bf16.xpose.msra.mxu0 0
        %578 = vmatpush.bf16.xpose.msra.mxu0 0
        %579 = vmatpush.bf16.xpose.msra.mxu0 %v570
        %580 = vmatmul.bf16.gmra.mxu0 %v567
        %v581 = vpop.f32.mrf.mxu0
        %v582 = vadd.f32 %v398, %v581
        %v583 = vpop.f32.mrf.mxu0
        %584 = vdwg.mxu0
        %v585 = vsel %vm493, %v510, -inf
        %586 = vmax.xlane.f32.xlu0 %v585
        %v587 = vpop.xlane.xlu0 %586
        %v588 = vsel %vm493, %v534, -inf
        %589 = vmax.xlane.f32.xlu0 %v588
        %v590 = vpop.xlane.xlu0 %589
        %v591 = vsel %vm493, %v558, -inf
        %592 = vmax.xlane.f32.xlu0 %v591
        %v593 = vpop.xlane.xlu0 %592
        %v594 = vsel %vm493, %v582, -inf
        %595 = vmax.xlane.f32.xlu0 %v594
        %v596 = vpop.xlane.xlu0 %595
        %v597 = vsub.f32 %v510, %v587
        %v598 = vsub.f32 %v534, %v590
        %v599 = vsub.f32 %v558, %v593
        %v600 = vsub.f32 %v582, %v596
        %v601 = vmul.f32 %v597, 1.442695
        %v602 = vpow.pop %v601
        %v603 = vmul.f32 %v598, 1.442695
        %v604 = vpow.pop %v603
        %v605 = vmul.f32 %v599, 1.442695
        %v606 = vpow.pop %v605
        %v607 = vmul.f32 %v600, 1.442695
        %v608 = vpow.pop %v607
        %v609 = vsel %vm493, %v602, 0.0
        %610 = vadd.xlane.f32.xlu0 %v609
        %v611 = vpop.xlane.xlu0 %610
        %v612 = vsel %vm493, %v604, 0.0
        %613 = vadd.xlane.f32.xlu0 %v612
        %v614 = vpop.xlane.xlu0 %613
        %v615 = vsel %vm493, %v606, 0.0
        %616 = vadd.xlane.f32.xlu0 %v615
        %v617 = vpop.xlane.xlu0 %616
        %v618 = vsel %vm493, %v608, 0.0
        %619 = vadd.xlane.f32.xlu0 %v618
        %v620 = vpop.xlane.xlu0 %619
        %v621 = vrcp.pop %v611
        %v622 = vrcp.pop %v614
        %v623 = vrcp.pop %v617
        %v624 = vrcp.pop %v620
        %v625 = vmul.f32 %v602, %v621
        %v626 = vmul.f32 %v604, %v622
        %v627 = vmul.f32 %v606, %v623
        %v628 = vmul.f32 %v608, %v624
        %v629 = vpack.c.bf16 %v625, %v625
        %v630 = vpack.c.bf16 %v626, %v626
        %v631 = vpack.c.bf16 %v627, %v627
        %v632 = vpack.c.bf16 %v628, %v628
        %633 = vrot.lane.b32.xlu0 %v490, 64
        %v634 = vpop.permute.xlu0 %633
        %v636 = vsel %vm493, %v629, 0
        %vm638 = vcmask 1043456
        %v640 = vsel %vm638, %v634, 0
        %642 = vmatpush.bf16.msra.mxu0 0
        %643 = vmatpush.bf16.msra.mxu0 0
        %644 = vmatpush.bf16.msra.mxu0 0
        %645 = vmatpush.bf16.msra.mxu0 0
        %646 = vmatpush.bf16.msra.mxu0 0
        %647 = vmatpush.bf16.msra.mxu0 0
        %648 = vmatpush.bf16.msra.mxu0 0
        %649 = vmatpush.bf16.msra.mxu0 %v640
        %650 = vmatmul.bf16.gmra.mxu0 %v636
        %v651 = vpop.f32.mrf.mxu0
        %v652 = vadd.f32 0.0, %v651
        %v653 = vpop.f32.mrf.mxu0
        %654 = vdwg.mxu0
        %655 = vrot.lane.b32.xlu0 %v515, 64
        %v656 = vpop.permute.xlu0 %655
        %v658 = vsel %vm493, %v630, 0
        %v661 = vsel %vm638, %v656, 0
        %663 = vmatpush.bf16.msra.mxu0 0
        %664 = vmatpush.bf16.msra.mxu0 0
        %665 = vmatpush.bf16.msra.mxu0 0
        %666 = vmatpush.bf16.msra.mxu0 0
        %667 = vmatpush.bf16.msra.mxu0 0
        %668 = vmatpush.bf16.msra.mxu0 0
        %669 = vmatpush.bf16.msra.mxu0 0
        %670 = vmatpush.bf16.msra.mxu0 %v661
        %671 = vmatmul.bf16.gmra.mxu0 %v658
        %v672 = vpop.f32.mrf.mxu0
        %v673 = vadd.f32 0.0, %v672
        %v674 = vpop.f32.mrf.mxu0
        %675 = vdwg.mxu0
        %676 = vrot.lane.b32.xlu0 %v539, 64
        %v677 = vpop.permute.xlu0 %676
        %v679 = vsel %vm493, %v631, 0
        %v682 = vsel %vm638, %v677, 0
        %684 = vmatpush.bf16.msra.mxu0 0
        %685 = vmatpush.bf16.msra.mxu0 0
        %686 = vmatpush.bf16.msra.mxu0 0
        %687 = vmatpush.bf16.msra.mxu0 0
        %688 = vmatpush.bf16.msra.mxu0 0
        %689 = vmatpush.bf16.msra.mxu0 0
        %690 = vmatpush.bf16.msra.mxu0 0
        %691 = vmatpush.bf16.msra.mxu0 %v682
        %692 = vmatmul.bf16.gmra.mxu0 %v679
        %v693 = vpop.f32.mrf.mxu0
        %v694 = vadd.f32 0.0, %v693
        %v695 = vpop.f32.mrf.mxu0
        %696 = vdwg.mxu0
        %697 = vrot.lane.b32.xlu0 %v563, 64
        %v698 = vpop.permute.xlu0 %697
        %v700 = vsel %vm493, %v632, 0
        %v703 = vsel %vm638, %v698, 0
        %705 = vmatpush.bf16.msra.mxu0 0
        %706 = vmatpush.bf16.msra.mxu0 0
        %707 = vmatpush.bf16.msra.mxu0 0
        %708 = vmatpush.bf16.msra.mxu0 0
        %709 = vmatpush.bf16.msra.mxu0 0
        %710 = vmatpush.bf16.msra.mxu0 0
        %711 = vmatpush.bf16.msra.mxu0 0
        %712 = vmatpush.bf16.msra.mxu0 %v703
        %713 = vmatmul.bf16.gmra.mxu0 %v700
        %v714 = vpop.f32.mrf.mxu0
        %v715 = vadd.f32 0.0, %v714
        %v716 = vpop.f32.mrf.mxu0
        %717 = vdwg.mxu0
        %v718 = vpack.c.bf16 %v652, %v652
        %v719 = vpack.c.bf16 %v673, %v673
        %v720 = vpack.c.bf16 %v694, %v694
        %v721 = vpack.c.bf16 %v715, %v715
        %v722 = vld [vmem:[%s4] sm:$0xf]
        %v723 = vld [vmem:[%s4 + $0x4] sm:$0xf]
        %v724 = vld [vmem:[%s4 + $0x8] sm:$0xf]
        %v725 = vld [vmem:[%s4 + $0xc] sm:$0xf]
        %v727 = vsel %vm493, %v718, 0
        %v730 = vsel %vm638, %v722, 0
        %732 = vmatpush.bf16.msra.mxu0 0
        %733 = vmatpush.bf16.msra.mxu0 0
        %734 = vmatpush.bf16.msra.mxu0 0
        %735 = vmatpush.bf16.msra.mxu0 0
        %736 = vmatpush.bf16.msra.mxu0 0
        %737 = vmatpush.bf16.msra.mxu0 0
        %738 = vmatpush.bf16.msra.mxu0 0
        %739 = vmatpush.bf16.msra.mxu0 %v730
        %740 = vmatmul.bf16.gmra.mxu0 %v727
        %v741 = vpop.f32.mrf.mxu0
        %v742 = vadd.f32 0.0, %v741
        %v743 = vpop.f32.mrf.mxu0
        %744 = vdwg.mxu0
        %v746 = vsel %vm493, %v719, 0
        %v749 = vsel %vm638, %v723, 0
        %751 = vmatpush.bf16.msra.mxu0 0
        %752 = vmatpush.bf16.msra.mxu0 0
        %753 = vmatpush.bf16.msra.mxu0 0
        %754 = vmatpush.bf16.msra.mxu0 0
        %755 = vmatpush.bf16.msra.mxu0 0
        %756 = vmatpush.bf16.msra.mxu0 0
        %757 = vmatpush.bf16.msra.mxu0 0
        %758 = vmatpush.bf16.msra.mxu0 %v749
        %759 = vmatmul.bf16.gmra.mxu0 %v746
        %v760 = vpop.f32.mrf.mxu0
        %v761 = vadd.f32 0.0, %v760
        %v762 = vpop.f32.mrf.mxu0
        %763 = vdwg.mxu0
        %v765 = vsel %vm493, %v720, 0
        %v768 = vsel %vm638, %v724, 0
        %770 = vmatpush.bf16.msra.mxu0 0
        %771 = vmatpush.bf16.msra.mxu0 0
        %772 = vmatpush.bf16.msra.mxu0 0
        %773 = vmatpush.bf16.msra.mxu0 0
        %774 = vmatpush.bf16.msra.mxu0 0
        %775 = vmatpush.bf16.msra.mxu0 0
        %776 = vmatpush.bf16.msra.mxu0 0
        %777 = vmatpush.bf16.msra.mxu0 %v768
        %778 = vmatmul.bf16.gmra.mxu0 %v765
        %v779 = vpop.f32.mrf.mxu0
        %v780 = vadd.f32 0.0, %v779
        %v781 = vpop.f32.mrf.mxu0
        %782 = vdwg.mxu0
        %v784 = vsel %vm493, %v721, 0
        %v787 = vsel %vm638, %v725, 0
        %789 = vmatpush.bf16.msra.mxu0 0
        %790 = vmatpush.bf16.msra.mxu0 0
        %791 = vmatpush.bf16.msra.mxu0 0
        %792 = vmatpush.bf16.msra.mxu0 0
        %793 = vmatpush.bf16.msra.mxu0 0
        %794 = vmatpush.bf16.msra.mxu0 0
        %795 = vmatpush.bf16.msra.mxu0 0
        %796 = vmatpush.bf16.msra.mxu0 %v787
        %797 = vmatmul.bf16.gmra.mxu0 %v784
        %v798 = vpop.f32.mrf.mxu0
        %v799 = vadd.f32 0.0, %v798
        %v800 = vpop.f32.mrf.mxu0
        %801 = vdwg.mxu0
        %v802 = vsel %vm401, %v742, 0.0
        %v803 = vsel %vm401, %v761, 0.0
        %v804 = vadd.f32 %v802, %v803
        %v805 = vsel %vm401, %v780, 0.0
        %v806 = vadd.f32 %v804, %v805
        %v807 = vsel %vm401, %v799, 0.0
        %v808 = vadd.f32 %v806, %v807
        %v809 = vadd.f32 %v397, %v808
        %v810 = vld [vmem:[%s5] sm:$0x1]
        %v812 = vperm.slane %v810, 0
        %v814 = vadd.f32 %v809, %v812
        %s815 = sld [smem:[#allocation2 + $0x2]]
        %s816 = sld [smem:[#allocation2 + $0x3]]
        %v817 = vsel %vm401, %v814, 0.0
        %818 = vadd.xlane.f32.xlu0 %v817
        %v819 = vpop.xlane.xlu0 %818
        %v820 = vmul.f32 %v819, %v411
        %v821 = vmul.f32 %v814, %v814
        %v822 = vsel %vm401, %v821, 0.0
        %823 = vadd.xlane.f32.xlu0 %v822
        %v824 = vpop.xlane.xlu0 %823
        %v825 = vmul.f32 %v824, %v411
        %v826 = vmul.f32 %v820, %v820
        %v827 = vsub.f32 %v825, %v826
        %v828 = vadd.f32 %v827, 1e-05
        %v829 = vrsqrt.pop %v828
        %v830 = vmul.f32 %v829, %v828
        %v831 = vmul.f32 %v830, %v829
        %v832 = vmul.f32 0.5, %v831
        %v833 = vsub.f32 1.5, %v832
        %v834 = vmul.f32 %v829, %v833
        %vm835 = vweird.f32 %v828
        %vm836 = vweird.f32 %v829
        %vm837 = vmor %vm835, %vm836
        %v838 = vsel %vm837, %v829, %v834
        %v839 = vsub.f32 %v814, %v820
        %v840 = vstv %s815
        %v841 = vmul.f32 %v840, %v839
        %v842 = vmul.f32 %v841, %v838
        %v843 = vstv %s816
        %v844 = vadd.f32 %v842, %v843
        %v845 = vpack.c.bf16 %v844, %v844
        %v846 = vld [vmem:[%s6] sm:$0xf]
        %v847 = vld [vmem:[%s6 + $0x4] sm:$0xf]
        %v848 = vld [vmem:[%s6 + $0x8] sm:$0xf]
        %v849 = vld [vmem:[%s6 + $0xc] sm:$0xf]
        %v850 = vld [vmem:[%s7] sm:$0x1]
        %v852 = vperm.slane %v850, 0
        %v858 = vunpack.c.l.b16 %v846
        %v859 = vunpack.c.l.b16 %v847
        %v860 = vunpack.c.l.b16 %v848
        %v861 = vunpack.c.l.b16 %v849
        %v862 = vpack.c.b16 %v859, %v858
        %v863 = vpack.c.b16 %v861, %v860
        %v867 = vsel %vm401, %v845, 0
        %869 = vmatpush.bf16.msra.mxu0 0
        %870 = vmatpush.bf16.msra.mxu0 0
        %871 = vmatpush.bf16.msra.mxu0 0
        %872 = vmatpush.bf16.msra.mxu0 0
        %873 = vmatpush.bf16.msra.mxu0 0
        %874 = vmatpush.bf16.msra.mxu0 0
        %875 = vmatpush.bf16.msra.mxu0 %v863
        %876 = vmatpush.bf16.msra.mxu0 %v862
        %877 = vmatmul.bf16.gmra.mxu0 %v867
        %v878 = vpop.f32.mrf.mxu0
        %v879 = vadd.f32 %v852, %v878
        %v880 = vpop.f32.mrf.mxu0
        %881 = vdwg.mxu0
        %v882 = vmul.f32 %v879, 0.5
        %v883 = vmul.f32 %v879, 0.70710677
        %v884 = vmul.f32 %v883, %v883
        %v885 = vmin.f32 16.0, %v884
        %v886 = vmul.f32 %v885, 2.1237322e-06
        %v887 = vadd.f32 %v886, 0.00028619796
        %v888 = vmul.f32 %v885, %v887
        %v889 = vadd.f32 %v888, 0.0036580483
        %v890 = vmul.f32 %v885, %v889
        %v891 = vadd.f32 %v890, 0.05243302
        %v892 = vmul.f32 %v885, %v891
        %v893 = vadd.f32 %v892, 0.18741608
        %v894 = vmul.f32 %v885, %v893
        %v895 = vadd.f32 %v894, 1.1283791
        %v896 = vmul.f32 %v883, %v895
        %v897 = vmul.f32 %v885, 3.8918573e-05
        %v898 = vadd.f32 %v897, 0.001143296
        %v899 = vmul.f32 %v885, %v898
        %v900 = vadd.f32 %v899, 0.014752088
        %v901 = vmul.f32 %v885, %v900
        %v902 = vadd.f32 %v901, 0.112945676
        %v903 = vmul.f32 %v885, %v902
        %v904 = vadd.f32 %v903, 0.4994258
        %v905 = vmul.f32 %v885, %v904
        %v906 = vadd.f32 %v905, 1.0
        %v907 = vrcp.pop %v906
        %v908 = vmul.f32 %v906, %v907
        %v909 = vsub.f32 1.0, %v908
        %v910 = vmul.f32 %v907, %v909
        %v911 = vadd.f32 %v907, %v910
        %vm912 = vweird.f32 %v906
        %vm913 = vweird.f32 %v907
        %vm914 = vmor %vm912, %vm913
        %v915 = vsel %vm914, %v907, %v911
        %v916 = vand.u32 2147483647, %v906
        %vm917 = vcmp.eq.f32.partialorder %v916, 8.507059e+37
        %v918 = vand.u32 %v906, 2147483648
        %v919 = vor.u32 1.1754944e-38, %v918
        %v920 = vsel %vm917, %v919, %v915
        %v921 = vmul.f32 %v896, %v920
        %v922 = vmin.f32 %v921, 1.0
        %v923 = vmax.f32 %v922, -1.0
        %v924 = vadd.f32 %v923, 1.0
        %v925 = vmul.f32 %v882, %v924
        %v926 = vpack.c.bf16 %v925, %v925
        %v927 = vld [vmem:[%s8] sm:$0xf]
        %v928 = vld [vmem:[%s8 + $0x4] sm:$0xf]
        %v929 = vld [vmem:[%s8 + $0x8] sm:$0xf]
        %v930 = vld [vmem:[%s8 + $0xc] sm:$0xf]
        %v931 = vld [vmem:[%s8 + $0x10] sm:$0xf]
        %v932 = vld [vmem:[%s8 + $0x14] sm:$0xf]
        %v933 = vld [vmem:[%s8 + $0x18] sm:$0xf]
        %v934 = vld [vmem:[%s8 + $0x1c] sm:$0xf]
        %v935 = vld [vmem:[%s8 + $0x20] sm:$0xf]
        %v936 = vld [vmem:[%s8 + $0x24] sm:$0xf]
        %v937 = vld [vmem:[%s8 + $0x28] sm:$0xf]
        %v938 = vld [vmem:[%s8 + $0x2c] sm:$0xf]
        %v939 = vld [vmem:[%s8 + $0x30] sm:$0xf]
        %v940 = vld [vmem:[%s8 + $0x34] sm:$0xf]
        %v941 = vld [vmem:[%s8 + $0x38] sm:$0xf]
        %v942 = vld [vmem:[%s8 + $0x3c] sm:$0xf]
        %v943 = vld [vmem:[%s9] sm:$0x1]
        %v945 = vperm.slane %v943, 0
        %v963 = vunpack.c.l.b16 %v927
        %v964 = vunpack.c.l.b16 %v928
        %v965 = vunpack.c.l.b16 %v929
        %v966 = vunpack.c.l.b16 %v930
        %v967 = vunpack.c.l.b16 %v931
        %v968 = vunpack.c.l.b16 %v932
        %v969 = vunpack.c.l.b16 %v933
        %v970 = vunpack.c.l.b16 %v934
        %v971 = vunpack.c.l.b16 %v935
        %v972 = vunpack.c.l.b16 %v936
        %v973 = vunpack.c.l.b16 %v937
        %v974 = vunpack.c.l.b16 %v938
        %v975 = vunpack.c.l.b16 %v939
        %v976 = vunpack.c.l.b16 %v940
        %v977 = vunpack.c.l.b16 %v941
        %v978 = vunpack.c.l.b16 %v942
        %v979 = vpack.c.b16 %v964, %v963
        %v980 = vpack.c.b16 %v966, %v965
        %v981 = vpack.c.b16 %v968, %v967
        %v982 = vpack.c.b16 %v970, %v969
        %v983 = vpack.c.b16 %v972, %v971
        %v984 = vpack.c.b16 %v974, %v973
        %v985 = vpack.c.b16 %v976, %v975
        %v986 = vpack.c.b16 %v978, %v977
        %995 = vmatpush.bf16.msra.mxu0 %v986
        %996 = vmatpush.bf16.msra.mxu0 %v985
        %997 = vmatpush.bf16.msra.mxu0 %v984
        %998 = vmatpush.bf16.msra.mxu0 %v983
        %999 = vmatpush.bf16.msra.mxu0 %v982
        %1000 = vmatpush.bf16.msra.mxu0 %v981
        %1001 = vmatpush.bf16.msra.mxu0 %v980
        %1002 = vmatpush.bf16.msra.mxu0 %v979
        %1003 = vmatmul.bf16.gmra.mxu0 %v926
        %v1004 = vpop.f32.mrf.mxu0
        %v1005 = vadd.f32 %v945, %v1004
        %v1006 = vpop.f32.mrf.mxu0
        %1007 = vdwg.mxu0
        %v1008 = vadd.f32 %v814, %v1005
        %1009 = vst.msk [vmem:[%s391] sm:$0xff] %vm401, %v1008
        %s1010 = sand.u32 %s270, 1
        %s1011 = scalar_lea.sflag [#allocation3], %s1010
        %s1012 = sand.u32 %s270, 1
        %s1013 = smul.addr %s1012, 8
        %s1014 = scalar_lea.vmem [#allocation5], %s1013
        // Predicated region
        $region69: #{layer_forward.1} parent=63 // pred_check
          %p1015 = pneg %p280
        $region70: #{layer_forward.1} parent=63 // pred_check_branch
          %1017 = sbr.rel (%p1015) target = $region72
        $region71: #{layer_forward.1} parent=63 // pred_region
          %1019 = vsyncadd %s1011, 0
          %s1020 = smul.addr %s26, 8
          %s1021 = scalar_lea.hbm %s11, %s1020
          %s1023 = sshll.u32 %s1014, 4
          %s1024 = int_to_ptr.vmem [resolvable:$true] %s1023
          %s1025 = sshll.u32 %s1021, 4
          %s1026 = int_to_ptr.hbm [resolvable:$true] %s1025
          %1028 = dma.vmem_to_hbm [thread:$0]  %s1024, 128, %s1026, %s1011
        $region72: #{layer_forward.1} parent=63 // pred_fallthru
          _
      $region64: #{layer_forward.1} parent=5 // pred_fallthru
        _
      %p1029 = scmp.le.s32.totalorder 2, %s21
      // Predicated region
      $region73: #{layer_forward.1} parent=5 // pred_check
        %p1030 = pneg %p1029
      $region74: #{layer_forward.1} parent=5 // pred_check_branch
        %1032 = sbr.rel (%p1030) target = $region76
      $region75: #{layer_forward.1} parent=5 // pred_region
        %s1033 = ssub.s32 %s21, 2
        // Predicated region
        $region77: #{layer_forward.1} parent=75 // pred_check
          %p1034 = pneg %p286
        $region78: #{layer_forward.1} parent=75 // pred_check_branch
          %1036 = sbr.rel (%p1034) target = $region80
        $region79: #{layer_forward.1} parent=75 // pred_region
          %s1037 = sand.u32 %s271, 1
          %s1038 = scalar_lea.sflag [#allocation3], %s1037
          %s1039 = sand.u32 %s271, 1
          %s1040 = smul.addr %s1039, 8
          %s1041 = scalar_lea.vmem [#allocation5], %s1040
          %1043 = dma.done %s1038, 128
        $region80: #{layer_forward.1} parent=75 // pred_fallthru
          _
      $region76: #{layer_forward.1} parent=5 // pred_fallthru
        _
    $region6: #{layer_forward.1} parent=1 // loop_footer
      %s25 = sadd.s32 1, %s21
    $region7: #{layer_forward.1} parent=1 // loop_footer_branch
      %20 = sbr.rel target = $region3
    $region8: #{layer_forward.1} parent=1 // loop_exit
      _
    %1044 = vsyncpa [#allocation3], 1
    %s1045 = scalar_lea.sflag [#allocation3], 1
    %1046 = vsyncpa %s1045, 1
    %1047 = vsyncpa [#allocation4], 1
    %s1048 = scalar_lea.sflag [#allocation4], 1
    %1049 = vsyncpa %s1048, 1

</llo_original>
